<compile_context>
chip_gen: v7x
topology: tpu7x:2x2x1
jax: 0.10.0
libtpu: 0.0.40
codegen_flags: <defaults>
</compile_context>

<pallas_src>
import functools

import jax
import jax.numpy as jnp
from jax.experimental import pallas as pl
from jax.experimental.pallas import tpu as pltpu


# ---------------------------------------------------------------------------
# Fused Pallas kernel: all GCN layers in one body, H resident in VMEM.
# ---------------------------------------------------------------------------
def _gcn_fused_kernel(*refs, num_layers):
    adj_ref = refs[0]
    x_ref = refs[1]
    w_refs = refs[2:2 + num_layers]
    o_ref = refs[2 + num_layers]

    adj = adj_ref[...]          # [N, N]  loaded once, reused by every layer
    h = x_ref[...]              # [N, Fp] (lane-padded features)

    # Static Python loop -> fully unrolled (num_layers is a compile-time const).
    for i in range(num_layers):
        support = jnp.dot(h, w_refs[i][...], preferred_element_type=jnp.float32)
        h = jnp.dot(adj, support, preferred_element_type=jnp.float32)
        if i < num_layers - 1:
            h = jnp.maximum(h, 0.0)   # ReLU; eval-mode dropout is identity

    o_ref[...] = h.astype(o_ref.dtype)


def _pad_to(x, rows, cols):
    r, c = x.shape
    return jnp.pad(x, ((0, rows - r), (0, cols - c)))


def gcn_forward(x, adj, weights):
    """Fused GCN forward.  x: [N, in_feats], adj: [N, N], weights: list of [Fin_i, Fout_i]."""
    N, in_feats = x.shape
    n_classes = weights[-1].shape[1]
    num_layers = len(weights)

    # Lane-dense padding of the feature axis (biggest single kernel-side lever).
    max_dim = max([in_feats] + [w.shape[0] for w in weights] + [w.shape[1] for w in weights])
    fp = max(128, ((max_dim + 127) // 128) * 128)

    x_p = _pad_to(x.astype(jnp.float32), N, fp)
    w_p = [_pad_to(w.astype(jnp.float32), fp, fp) for w in weights]

    out = pl.pallas_call(
        functools.partial(_gcn_fused_kernel, num_layers=num_layers),
        out_shape=jax.ShapeDtypeStruct((N, fp), jnp.float32),
        grid=(1,),
        in_specs=[pl.BlockSpec((N, N), lambda i: (0, 0)),
                  pl.BlockSpec((N, fp), lambda i: (0, 0))]
                 + [pl.BlockSpec((fp, fp), lambda i: (0, 0)) for _ in range(num_layers)],
        out_specs=pl.BlockSpec((N, fp), lambda i: (0, 0)),
        compiler_params=pltpu.CompilerParams(
            dimension_semantics=("arbitrary",),
            vmem_limit_bytes=64 * 1024 * 1024,
        ),
    )(adj.astype(jnp.float32), x_p, *w_p)

    return out[:, :n_classes]


# ---------------------------------------------------------------------------
# Parameter init (PyTorch xavier_uniform_ equivalent) and graph construction.
# ---------------------------------------------------------------------------
def xavier_uniform(key, fan_in, fan_out):
    bound = jnp.sqrt(6.0 / jnp.float32(fan_in + fan_out))
    return jax.random.uniform(key, (fan_in, fan_out), jnp.float32, -bound, bound)


def build_graph(key, n_nodes):
    """Deterministic random undirected graph; returns D^-1/2 (A + I) D^-1/2."""
    p = jax.random.uniform(key, (n_nodes, n_nodes))
    a = (p < 0.05).astype(jnp.float32)
    a = jnp.maximum(a, a.T)                                        # symmetrize
    a = jnp.maximum(a, jnp.eye(n_nodes, dtype=jnp.float32))        # self loops
    d_inv_sqrt = 1.0 / jnp.sqrt(a.sum(axis=1))
    return a * d_inv_sqrt[:, None] * d_inv_sqrt[None, :]


if __name__ == "__main__":
    # Small, TPU-friendly shapes consistent with the module.
    N = 128           # number of nodes
    in_feats = 32
    n_hidden = 32
    n_classes = 16
    graph_hops = 3    # -> GCNLayer(in,hid), GCNLayer(hid,hid), GCNLayer(hid,classes)
    dropout = 0.5     # eval mode -> identity

    root = jax.random.PRNGKey(0)
    k_feat, k_graph, *k_layers = jax.random.split(root, 2 + graph_hops)

    x = jax.random.normal(k_feat, (N, in_feats), jnp.float32)
    adj = build_graph(k_graph, N)

    dims = [in_feats, n_hidden] + [n_hidden] * (graph_hops - 2) + [n_classes]
    weights = [xavier_uniform(k_layers[i], dims[i], dims[i + 1])
               for i in range(len(dims) - 1)]

    out = gcn_forward(x, adj, weights)
    out = jax.block_until_ready(out)

    # Pure-JAX reference for a sanity check.
    def ref_forward():
        h = x
        for i, w in enumerate(weights):
            h = adj @ (h @ w)
            if i < len(weights) - 1:
                h = jnp.maximum(h, 0.0)
        return h

    ref = ref_forward()
    assert out.shape == (N, n_classes)
    assert jnp.allclose(out, ref, atol=1e-3, rtol=1e-3), "mismatch vs reference"

    print("KERNEL_OK")
</pallas_src>

<mosaic_0001>
module attributes {stable_mosaic.version = 11 : i64} {
  func.func @_gcn_fused_kernel(%arg0: i32, %arg1: memref<128x128xf32, #tpu.memory_space<vmem>>, %arg2: memref<128x128xf32, #tpu.memory_space<vmem>>, %arg3: memref<128x128xf32, #tpu.memory_space<vmem>>, %arg4: memref<128x128xf32, #tpu.memory_space<vmem>>, %arg5: memref<128x128xf32, #tpu.memory_space<vmem>>, %arg6: memref<128x128xf32, #tpu.memory_space<vmem>>) attributes {dimension_semantics = [#tpu.dimension_semantics<arbitrary>], iteration_bounds = array<i64: 1>, scalar_prefetch = 0 : i64, scratch_operands = 0 : i64, tpu.core_type = #tpu.core_type<tc>, window_params = [{pipeline_mode = #tpu.pipeline_mode<synchronous>, transform_indices = @transform_0, window_bounds = array<i64: 128, 128>}, {pipeline_mode = #tpu.pipeline_mode<synchronous>, transform_indices = @transform_1, window_bounds = array<i64: 128, 128>}, {pipeline_mode = #tpu.pipeline_mode<synchronous>, transform_indices = @transform_2, window_bounds = array<i64: 128, 128>}, {pipeline_mode = #tpu.pipeline_mode<synchronous>, transform_indices = @transform_3, window_bounds = array<i64: 128, 128>}, {pipeline_mode = #tpu.pipeline_mode<synchronous>, transform_indices = @transform_4, window_bounds = array<i64: 128, 128>}, {pipeline_mode = #tpu.pipeline_mode<synchronous>, transform_indices = @transform_5, window_bounds = array<i64: 128, 128>}]} {
    %c0 = arith.constant 0 : index
    %c0_0 = arith.constant 0 : index
    %0 = vector.load %arg1[%c0, %c0_0] : memref<128x128xf32, #tpu.memory_space<vmem>>, vector<128x128xf32>
    %c0_1 = arith.constant 0 : index
    %c0_2 = arith.constant 0 : index
    %1 = vector.load %arg2[%c0_1, %c0_2] : memref<128x128xf32, #tpu.memory_space<vmem>>, vector<128x128xf32>
    %c0_3 = arith.constant 0 : index
    %c0_4 = arith.constant 0 : index
    %2 = vector.load %arg3[%c0_3, %c0_4] : memref<128x128xf32, #tpu.memory_space<vmem>>, vector<128x128xf32>
    %cst = arith.constant dense<0.000000e+00> : vector<128x128xf32>
    %3 = tpu.matmul %1, %2, %cst {dimension_numbers = #tpu.dot_dimension_numbers<[1], [0], [0], [1], [0, 0, 1, 1], [], []>} : vector<128x128xf32>, vector<128x128xf32>, vector<128x128xf32> -> vector<128x128xf32>
    %cst_5 = arith.constant dense<0.000000e+00> : vector<128x128xf32>
    %4 = tpu.matmul %0, %3, %cst_5 {dimension_numbers = #tpu.dot_dimension_numbers<[1], [0], [0], [1], [0, 0, 1, 1], [], []>} : vector<128x128xf32>, vector<128x128xf32>, vector<128x128xf32> -> vector<128x128xf32>
    %cst_6 = arith.constant 0.000000e+00 : f32
    %5 = vector.broadcast %cst_6 : f32 to vector<128x128xf32>
    %6 = arith.maximumf %4, %5 : vector<128x128xf32>
    %c0_7 = arith.constant 0 : index
    %c0_8 = arith.constant 0 : index
    %7 = vector.load %arg4[%c0_7, %c0_8] : memref<128x128xf32, #tpu.memory_space<vmem>>, vector<128x128xf32>
    %cst_9 = arith.constant dense<0.000000e+00> : vector<128x128xf32>
    %8 = tpu.matmul %6, %7, %cst_9 {dimension_numbers = #tpu.dot_dimension_numbers<[1], [0], [0], [1], [0, 0, 1, 1], [], []>} : vector<128x128xf32>, vector<128x128xf32>, vector<128x128xf32> -> vector<128x128xf32>
    %cst_10 = arith.constant dense<0.000000e+00> : vector<128x128xf32>
    %9 = tpu.matmul %0, %8, %cst_10 {dimension_numbers = #tpu.dot_dimension_numbers<[1], [0], [0], [1], [0, 0, 1, 1], [], []>} : vector<128x128xf32>, vector<128x128xf32>, vector<128x128xf32> -> vector<128x128xf32>
    %cst_11 = arith.constant 0.000000e+00 : f32
    %10 = vector.broadcast %cst_11 : f32 to vector<128x128xf32>
    %11 = arith.maximumf %9, %10 : vector<128x128xf32>
    %c0_12 = arith.constant 0 : index
    %c0_13 = arith.constant 0 : index
    %12 = vector.load %arg5[%c0_12, %c0_13] : memref<128x128xf32, #tpu.memory_space<vmem>>, vector<128x128xf32>
    %cst_14 = arith.constant dense<0.000000e+00> : vector<128x128xf32>
    %13 = tpu.matmul %11, %12, %cst_14 {dimension_numbers = #tpu.dot_dimension_numbers<[1], [0], [0], [1], [0, 0, 1, 1], [], []>} : vector<128x128xf32>, vector<128x128xf32>, vector<128x128xf32> -> vector<128x128xf32>
    %cst_15 = arith.constant dense<0.000000e+00> : vector<128x128xf32>
    %14 = tpu.matmul %0, %13, %cst_15 {dimension_numbers = #tpu.dot_dimension_numbers<[1], [0], [0], [1], [0, 0, 1, 1], [], []>} : vector<128x128xf32>, vector<128x128xf32>, vector<128x128xf32> -> vector<128x128xf32>
    %c0_16 = arith.constant 0 : index
    %c0_17 = arith.constant 0 : index
    %15 = vector.load %arg6[%c0_16, %c0_17] : memref<128x128xf32, #tpu.memory_space<vmem>>, vector<128x128xf32>
    tpu.vector_store %arg6[%c0_16, %c0_17], %14 {strides = array<i32>} : memref<128x128xf32, #tpu.memory_space<vmem>>, vector<128x128xf32>,
    return
  }
  func.func @transform_0(%arg0: i32) -> (i32, i32) {
    %c0_i32 = arith.constant 0 : i32
    %c0_i32_0 = arith.constant 0 : i32
    %c0_i32_1 = arith.constant 0 : i32
    return %c0_i32, %c0_i32_0 : i32, i32
  }
  func.func @transform_1(%arg0: i32) -> (i32, i32) {
    %c0_i32 = arith.constant 0 : i32
    %c0_i32_0 = arith.constant 0 : i32
    %c0_i32_1 = arith.constant 0 : i32
    return %c0_i32, %c0_i32_0 : i32, i32
  }
  func.func @transform_2(%arg0: i32) -> (i32, i32) {
    %c0_i32 = arith.constant 0 : i32
    %c0_i32_0 = arith.constant 0 : i32
    %c0_i32_1 = arith.constant 0 : i32
    return %c0_i32, %c0_i32_0 : i32, i32
  }
  func.func @transform_3(%arg0: i32) -> (i32, i32) {
    %c0_i32 = arith.constant 0 : i32
    %c0_i32_0 = arith.constant 0 : i32
    %c0_i32_1 = arith.constant 0 : i32
    return %c0_i32, %c0_i32_0 : i32, i32
  }
  func.func @transform_4(%arg0: i32) -> (i32, i32) {
    %c0_i32 = arith.constant 0 : i32
    %c0_i32_0 = arith.constant 0 : i32
    %c0_i32_1 = arith.constant 0 : i32
    return %c0_i32, %c0_i32_0 : i32, i32
  }
  func.func @transform_5(%arg0: i32) -> (i32, i32) {
    %c0_i32 = arith.constant 0 : i32
    %c0_i32_0 = arith.constant 0 : i32
    %c0_i32_1 = arith.constant 0 : i32
    return %c0_i32, %c0_i32_0 : i32, i32
  }
}

</mosaic_0001>

<llo_original>
// kernel: tpu_custom_call.1
$region0: #{tpu_custom_call.1}
  #allocation0 [shape = 'u32[]', space=smem, size = 0x4, offset = 0x4, fixed_abs, tag = 'smem constant byte address 0x4 - core index']
  #allocation1 [shape = 'u32[144,128]{1,0:T(1,128)}', space=vmem, size = 0x12000, scoped, tag = 'internal scratch']
  %s0 = inlined_call_operand.hbm [shape: f32[128,128], index: 0, kind: input, shape index: {}]
  %s1 = inlined_call_operand.hbm [shape: f32[128,128], index: 1, kind: input, shape index: {}]
  %s2 = inlined_call_operand.hbm [shape: f32[128,128], index: 2, kind: input, shape index: {}]
  %s3 = inlined_call_operand.hbm [shape: f32[128,128], index: 3, kind: input, shape index: {}]
  %s4 = inlined_call_operand.hbm [shape: f32[128,128], index: 4, kind: input, shape index: {}]
  %s5 = inlined_call_operand.hbm [shape: f32[128,128], index: 5, kind: output, shape index: {}]
  %s6 = sld [smem:[#allocation0]]
  $region50: #{tpu_custom_call.1} parent=0
    _
  %s8 = ssub.s32 1, %s6
  %s9 = scalar_select 0, %s8, %s6
  $region1: #{tpu_custom_call.1} parent=0
    #allocation2 [shape = 'u8[65536]{0}', space=vmem, size = 0x10000, scoped, tag = 'input window, operand 0, single buffered']
    #allocation3 [shape = 's32[1]{0}', space=sflag, size = 0x4, scoped, tag = 'scoped memory for tpu_custom_call.1']
    #allocation4 [shape = 's32[1]{0}', space=sflag, size = 0x4, scoped, tag = 'scoped memory for tpu_custom_call.1']
    #allocation5 [shape = 'u8[65536]{0}', space=vmem, size = 0x10000, scoped, tag = 'input window, operand 1, single buffered']
    #allocation6 [shape = 's32[1]{0}', space=sflag, size = 0x4, scoped, tag = 'scoped memory for tpu_custom_call.1']
    #allocation7 [shape = 'u8[65536]{0}', space=vmem, size = 0x10000, scoped, tag = 'input window, operand 2, single buffered']
    #allocation8 [shape = 'u8[65536]{0}', space=vmem, size = 0x10000, scoped, tag = 'input window, operand 3, single buffered']
    #allocation9 [shape = 's32[1]{0}', space=sflag, size = 0x4, scoped, tag = 'scoped memory for tpu_custom_call.1']
    #allocation10 [shape = 'u8[65536]{0}', space=vmem, size = 0x10000, scoped, tag = 'input window, operand 4, single buffered']
    #allocation11 [shape = 'u8[65536]{0}', space=vmem, size = 0x10000, scoped, tag = 'output window, operand 0, single buffered']
    %10 = vsyncpa [#allocation3], 0
    %11 = vsyncpa [#allocation6], 0
    %12 = vsyncpa [#allocation9], 0
    %13 = vsyncpa [#allocation4], 0
    // Predicated region
    $region2: #{tpu_custom_call.1} parent=1 // pred_check
      _
    $region3: #{tpu_custom_call.1} parent=1 // pred_check_branch
      %15 = sbr.rel (0) target = $region5
    $region4: #{tpu_custom_call.1} parent=1 // pred_region
      %s17 = ssub.s32 2048, 2048
      %18 = vsyncadd [#allocation3], %s17
      %s19 = sshll.u32 [#allocation2], 4
      %s20 = int_to_ptr.vmem [resolvable:$true] %s19
      %25 = dma.hbm_to_vmem [thread:$0]  %s0, 2048, %s20, [#allocation3], 128, 128, 8
    $region5: #{tpu_custom_call.1} parent=1 // pred_fallthru
      _
    // Predicated region
    $region6: #{tpu_custom_call.1} parent=1 // pred_check
      _
    $region7: #{tpu_custom_call.1} parent=1 // pred_check_branch
      %27 = sbr.rel (0) target = $region9
    $region8: #{tpu_custom_call.1} parent=1 // pred_region
      %s29 = ssub.s32 2048, 2048
      %30 = vsyncadd [#allocation6], %s29
      %s31 = sshll.u32 [#allocation5], 4
      %s32 = int_to_ptr.vmem [resolvable:$true] %s31
      %37 = dma.hbm_to_vmem [thread:$0]  %s1, 2048, %s32, [#allocation6], 128, 128, 8
    $region9: #{tpu_custom_call.1} parent=1 // pred_fallthru
      _
    // Predicated region
    $region10: #{tpu_custom_call.1} parent=1 // pred_check
      _
    $region11: #{tpu_custom_call.1} parent=1 // pred_check_branch
      %39 = sbr.rel (0) target = $region13
    $region12: #{tpu_custom_call.1} parent=1 // pred_region
      %s41 = ssub.s32 2048, 2048
      %42 = vsyncadd [#allocation6], %s41
      %s43 = sshll.u32 [#allocation7], 4
      %s44 = int_to_ptr.vmem [resolvable:$true] %s43
      %49 = dma.hbm_to_vmem [thread:$0]  %s2, 2048, %s44, [#allocation6], 128, 128, 8
    $region13: #{tpu_custom_call.1} parent=1 // pred_fallthru
      _
    // Predicated region
    $region14: #{tpu_custom_call.1} parent=1 // pred_check
      _
    $region15: #{tpu_custom_call.1} parent=1 // pred_check_branch
      %51 = sbr.rel (0) target = $region17
    $region16: #{tpu_custom_call.1} parent=1 // pred_region
      %s53 = ssub.s32 2048, 2048
      %54 = vsyncadd [#allocation9], %s53
      %s55 = sshll.u32 [#allocation8], 4
      %s56 = int_to_ptr.vmem [resolvable:$true] %s55
      %61 = dma.hbm_to_vmem [thread:$0]  %s3, 2048, %s56, [#allocation9], 128, 128, 8
    $region17: #{tpu_custom_call.1} parent=1 // pred_fallthru
      _
    // Predicated region
    $region18: #{tpu_custom_call.1} parent=1 // pred_check
      _
    $region19: #{tpu_custom_call.1} parent=1 // pred_check_branch
      %63 = sbr.rel (0) target = $region21
    $region20: #{tpu_custom_call.1} parent=1 // pred_region
      %s65 = ssub.s32 2048, 2048
      %66 = vsyncadd [#allocation9], %s65
      %s67 = sshll.u32 [#allocation10], 4
      %s68 = int_to_ptr.vmem [resolvable:$true] %s67
      %73 = dma.hbm_to_vmem [thread:$0]  %s4, 2048, %s68, [#allocation9], 128, 128, 8
    $region21: #{tpu_custom_call.1} parent=1 // pred_fallthru
      _
    // Predicated region
    $region22: #{tpu_custom_call.1} parent=1 // pred_check
      _
    $region23: #{tpu_custom_call.1} parent=1 // pred_check_branch
      %75 = sbr.rel (0) target = $region25
    $region24: #{tpu_custom_call.1} parent=1 // pred_region
      %76 = dma.done [#allocation3], 2048
    $region25: #{tpu_custom_call.1} parent=1 // pred_fallthru
      _
    // Predicated region
    $region26: #{tpu_custom_call.1} parent=1 // pred_check
      _
    $region27: #{tpu_custom_call.1} parent=1 // pred_check_branch
      %78 = sbr.rel (0) target = $region29
    $region28: #{tpu_custom_call.1} parent=1 // pred_region
      %79 = dma.done [#allocation6], 2048
    $region29: #{tpu_custom_call.1} parent=1 // pred_fallthru
      _
    // Predicated region
    $region30: #{tpu_custom_call.1} parent=1 // pred_check
      _
    $region31: #{tpu_custom_call.1} parent=1 // pred_check_branch
      %81 = sbr.rel (0) target = $region33
    $region32: #{tpu_custom_call.1} parent=1 // pred_region
      %82 = dma.done [#allocation6], 2048
    $region33: #{tpu_custom_call.1} parent=1 // pred_fallthru
      _
    // Predicated region
    $region34: #{tpu_custom_call.1} parent=1 // pred_check
      _
    $region35: #{tpu_custom_call.1} parent=1 // pred_check_branch
      %84 = sbr.rel (0) target = $region37
    $region36: #{tpu_custom_call.1} parent=1 // pred_region
      %85 = dma.done [#allocation9], 2048
    $region37: #{tpu_custom_call.1} parent=1 // pred_fallthru
      _
    // Predicated region
    $region38: #{tpu_custom_call.1} parent=1 // pred_check
      _
    $region39: #{tpu_custom_call.1} parent=1 // pred_check_branch
      %87 = sbr.rel (0) target = $region41
    $region40: #{tpu_custom_call.1} parent=1 // pred_region
      %88 = dma.done [#allocation9], 2048
    $region41: #{tpu_custom_call.1} parent=1 // pred_fallthru
      _
    %v89 = vld [vmem:[#allocation2] sm:$0xff]
    %v90 = vld [vmem:[#allocation2 + $0x8] sm:$0xff]
    %v91 = vld [vmem:[#allocation2 + $0x10] sm:$0xff]
    %v92 = vld [vmem:[#allocation2 + $0x18] sm:$0xff]
    %v93 = vld [vmem:[#allocation2 + $0x20] sm:$0xff]
    %v94 = vld [vmem:[#allocation2 + $0x28] sm:$0xff]
    %v95 = vld [vmem:[#allocation2 + $0x30] sm:$0xff]
    %v96 = vld [vmem:[#allocation2 + $0x38] sm:$0xff]
    %v97 = vld [vmem:[#allocation2 + $0x40] sm:$0xff]
    %v98 = vld [vmem:[#allocation2 + $0x48] sm:$0xff]
    %v99 = vld [vmem:[#allocation2 + $0x50] sm:$0xff]
    %v100 = vld [vmem:[#allocation2 + $0x58] sm:$0xff]
    %v101 = vld [vmem:[#allocation2 + $0x60] sm:$0xff]
    %v102 = vld [vmem:[#allocation2 + $0x68] sm:$0xff]
    %v103 = vld [vmem:[#allocation2 + $0x70] sm:$0xff]
    %v104 = vld [vmem:[#allocation2 + $0x78] sm:$0xff]
    %v105 = vld [vmem:[#allocation5] sm:$0xff]
    %v106 = vld [vmem:[#allocation5 + $0x8] sm:$0xff]
    %v107 = vld [vmem:[#allocation5 + $0x10] sm:$0xff]
    %v108 = vld [vmem:[#allocation5 + $0x18] sm:$0xff]
    %v109 = vld [vmem:[#allocation5 + $0x20] sm:$0xff]
    %v110 = vld [vmem:[#allocation5 + $0x28] sm:$0xff]
    %v111 = vld [vmem:[#allocation5 + $0x30] sm:$0xff]
    %v112 = vld [vmem:[#allocation5 + $0x38] sm:$0xff]
    %v113 = vld [vmem:[#allocation5 + $0x40] sm:$0xff]
    %v114 = vld [vmem:[#allocation5 + $0x48] sm:$0xff]
    %v115 = vld [vmem:[#allocation5 + $0x50] sm:$0xff]
    %v116 = vld [vmem:[#allocation5 + $0x58] sm:$0xff]
    %v117 = vld [vmem:[#allocation5 + $0x60] sm:$0xff]
    %v118 = vld [vmem:[#allocation5 + $0x68] sm:$0xff]
    %v119 = vld [vmem:[#allocation5 + $0x70] sm:$0xff]
    %v120 = vld [vmem:[#allocation5 + $0x78] sm:$0xff]
    %v121 = vld [vmem:[#allocation7] sm:$0xff]
    %v122 = vld [vmem:[#allocation7 + $0x8] sm:$0xff]
    %v123 = vld [vmem:[#allocation7 + $0x10] sm:$0xff]
    %v124 = vld [vmem:[#allocation7 + $0x18] sm:$0xff]
    %v125 = vld [vmem:[#allocation7 + $0x20] sm:$0xff]
    %v126 = vld [vmem:[#allocation7 + $0x28] sm:$0xff]
    %v127 = vld [vmem:[#allocation7 + $0x30] sm:$0xff]
    %v128 = vld [vmem:[#allocation7 + $0x38] sm:$0xff]
    %v129 = vld [vmem:[#allocation7 + $0x40] sm:$0xff]
    %v130 = vld [vmem:[#allocation7 + $0x48] sm:$0xff]
    %v131 = vld [vmem:[#allocation7 + $0x50] sm:$0xff]
    %v132 = vld [vmem:[#allocation7 + $0x58] sm:$0xff]
    %v133 = vld [vmem:[#allocation7 + $0x60] sm:$0xff]
    %v134 = vld [vmem:[#allocation7 + $0x68] sm:$0xff]
    %v135 = vld [vmem:[#allocation7 + $0x70] sm:$0xff]
    %v136 = vld [vmem:[#allocation7 + $0x78] sm:$0xff]
    %137 = vmatprep.subr.mxu0 0.0
    %138 = vmatpush1.msra.mxu0 %v121
    %139 = vmatprep.subr.mxu0 0.0
    %140 = vmatpush1.msra.mxu0 %v122
    %141 = vmatprep.subr.mxu0 0.0
    %142 = vmatpush1.msra.mxu0 %v123
    %143 = vmatprep.subr.mxu0 0.0
    %144 = vmatpush1.msra.mxu0 %v124
    %145 = vmatprep.subr.mxu0 0.0
    %146 = vmatpush1.msra.mxu0 %v125
    %147 = vmatprep.subr.mxu0 0.0
    %148 = vmatpush1.msra.mxu0 %v126
    %149 = vmatprep.subr.mxu0 0.0
    %150 = vmatpush1.msra.mxu0 %v127
    %151 = vmatprep.subr.mxu0 0.0
    %152 = vmatpush1.msra.mxu0 %v128
    %153 = vmatprep.subr.mxu0 0.0
    %154 = vmatpush1.msra.mxu0 %v129
    %155 = vmatprep.subr.mxu0 0.0
    %156 = vmatpush1.msra.mxu0 %v130
    %157 = vmatprep.subr.mxu0 0.0
    %158 = vmatpush1.msra.mxu0 %v131
    %159 = vmatprep.subr.mxu0 0.0
    %160 = vmatpush1.msra.mxu0 %v132
    %161 = vmatprep.subr.mxu0 0.0
    %162 = vmatpush1.msra.mxu0 %v133
    %163 = vmatprep.subr.mxu0 0.0
    %164 = vmatpush1.msra.mxu0 %v134
    %165 = vmatprep.subr.mxu0 0.0
    %166 = vmatpush1.msra.mxu0 %v135
    %167 = vmatprep.subr.mxu0 0.0
    %168 = vmatpush1.msra.mxu0 %v136
    %169 = vmatprep.subr.mxu0 0.0
    %170 = vmatpush1.msra.mxu0 0.0
    %171 = vmatprep.subr.mxu0 0.0
    %172 = vmatpush1.msra.mxu0 0.0
    %173 = vmatprep.subr.mxu0 0.0
    %174 = vmatpush1.msra.mxu0 0.0
    %175 = vmatprep.subr.mxu0 0.0
    %176 = vmatpush1.msra.mxu0 0.0
    %177 = vmatprep.subr.mxu0 0.0
    %178 = vmatpush1.msra.mxu0 0.0
    %179 = vmatprep.subr.mxu0 0.0
    %180 = vmatpush1.msra.mxu0 0.0
    %181 = vmatprep.subr.mxu0 0.0
    %182 = vmatpush1.msra.mxu0 0.0
    %183 = vmatprep.subr.mxu0 0.0
    %184 = vmatpush1.msra.mxu0 0.0
    %185 = vmatprep.subr.mxu0 0.0
    %186 = vmatpush1.msra.mxu0 0.0
    %187 = vmatprep.subr.mxu0 0.0
    %188 = vmatpush1.msra.mxu0 0.0
    %189 = vmatprep.subr.mxu0 0.0
    %190 = vmatpush1.msra.mxu0 0.0
    %191 = vmatprep.subr.mxu0 0.0
    %192 = vmatpush1.msra.mxu0 0.0
    %193 = vmatprep.subr.mxu0 0.0
    %194 = vmatpush1.msra.mxu0 0.0
    %195 = vmatprep.subr.mxu0 0.0
    %196 = vmatpush1.msra.mxu0 0.0
    %197 = vmatprep.subr.mxu0 0.0
    %198 = vmatpush1.msra.mxu0 0.0
    %199 = vmatprep.subr.mxu0 0.0
    %200 = vmatpush1.msra.mxu0 0.0
    %201 = vmatprep.mubr.f32.mxu0 0.0
    %202 = vmatmul.mubr.f32.gmra.mrb[0].mxu0 %v105
    %v203 = vpop.f32.mrb[0].mxu0
    %v204 = vadd.f32 0.0, %v203
    %v205 = vpop.f32.mrb[0].mxu0
    %206 = vmatprep.mubr.f32.mxu0 0.0
    %207 = vmatmul.mubr.f32.gmra.mrb[0].mxu0 %v106
    %v208 = vpop.f32.mrb[0].mxu0
    %v209 = vadd.f32 0.0, %v208
    %v210 = vpop.f32.mrb[0].mxu0
    %211 = vmatprep.mubr.f32.mxu0 0.0
    %212 = vmatmul.mubr.f32.gmra.mrb[0].mxu0 %v107
    %v213 = vpop.f32.mrb[0].mxu0
    %v214 = vadd.f32 0.0, %v213
    %v215 = vpop.f32.mrb[0].mxu0
    %216 = vmatprep.mubr.f32.mxu0 0.0
    %217 = vmatmul.mubr.f32.gmra.mrb[0].mxu0 %v108
    %v218 = vpop.f32.mrb[0].mxu0
    %v219 = vadd.f32 0.0, %v218
    %v220 = vpop.f32.mrb[0].mxu0
    %221 = vmatprep.mubr.f32.mxu0 0.0
    %222 = vmatmul.mubr.f32.gmra.mrb[0].mxu0 %v109
    %v223 = vpop.f32.mrb[0].mxu0
    %v224 = vadd.f32 0.0, %v223
    %v225 = vpop.f32.mrb[0].mxu0
    %226 = vmatprep.mubr.f32.mxu0 0.0
    %227 = vmatmul.mubr.f32.gmra.mrb[0].mxu0 %v110
    %v228 = vpop.f32.mrb[0].mxu0
    %v229 = vadd.f32 0.0, %v228
    %v230 = vpop.f32.mrb[0].mxu0
    %231 = vmatprep.mubr.f32.mxu0 0.0
    %232 = vmatmul.mubr.f32.gmra.mrb[0].mxu0 %v111
    %v233 = vpop.f32.mrb[0].mxu0
    %v234 = vadd.f32 0.0, %v233
    %v235 = vpop.f32.mrb[0].mxu0
    %236 = vmatprep.mubr.f32.mxu0 0.0
    %237 = vmatmul.mubr.f32.gmra.mrb[0].mxu0 %v112
    %v238 = vpop.f32.mrb[0].mxu0
    %v239 = vadd.f32 0.0, %v238
    %v240 = vpop.f32.mrb[0].mxu0
    %241 = vmatprep.mubr.f32.mxu0 0.0
    %242 = vmatmul.mubr.f32.gmra.mrb[0].mxu0 %v113
    %v243 = vpop.f32.mrb[0].mxu0
    %v244 = vadd.f32 0.0, %v243
    %v245 = vpop.f32.mrb[0].mxu0
    %246 = vmatprep.mubr.f32.mxu0 0.0
    %247 = vmatmul.mubr.f32.gmra.mrb[0].mxu0 %v114
    %v248 = vpop.f32.mrb[0].mxu0
    %v249 = vadd.f32 0.0, %v248
    %v250 = vpop.f32.mrb[0].mxu0
    %251 = vmatprep.mubr.f32.mxu0 0.0
    %252 = vmatmul.mubr.f32.gmra.mrb[0].mxu0 %v115
    %v253 = vpop.f32.mrb[0].mxu0
    %v254 = vadd.f32 0.0, %v253
    %v255 = vpop.f32.mrb[0].mxu0
    %256 = vmatprep.mubr.f32.mxu0 0.0
    %257 = vmatmul.mubr.f32.gmra.mrb[0].mxu0 %v116
    %v258 = vpop.f32.mrb[0].mxu0
    %v259 = vadd.f32 0.0, %v258
    %v260 = vpop.f32.mrb[0].mxu0
    %261 = vmatprep.mubr.f32.mxu0 0.0
    %262 = vmatmul.mubr.f32.gmra.mrb[0].mxu0 %v117
    %v263 = vpop.f32.mrb[0].mxu0
    %v264 = vadd.f32 0.0, %v263
    %v265 = vpop.f32.mrb[0].mxu0
    %266 = vmatprep.mubr.f32.mxu0 0.0
    %267 = vmatmul.mubr.f32.gmra.mrb[0].mxu0 %v118
    %v268 = vpop.f32.mrb[0].mxu0
    %v269 = vadd.f32 0.0, %v268
    %v270 = vpop.f32.mrb[0].mxu0
    %271 = vmatprep.mubr.f32.mxu0 0.0
    %272 = vmatmul.mubr.f32.gmra.mrb[0].mxu0 %v119
    %v273 = vpop.f32.mrb[0].mxu0
    %v274 = vadd.f32 0.0, %v273
    %v275 = vpop.f32.mrb[0].mxu0
    %276 = vmatprep.mubr.f32.mxu0 0.0
    %277 = vmatmul.mubr.f32.gmra.mrb[0].mxu0 %v120
    %v278 = vpop.f32.mrb[0].mxu0
    %v279 = vadd.f32 0.0, %v278
    %v280 = vpop.f32.mrb[0].mxu0
    %281 = vdwg.mxu0
    %282 = vmatprep.subr.mxu0 0.0
    %283 = vmatpush1.msra.mxu0 %v204
    %284 = vmatprep.subr.mxu0 0.0
    %285 = vmatpush1.msra.mxu0 %v209
    %286 = vmatprep.subr.mxu0 0.0
    %287 = vmatpush1.msra.mxu0 %v214
    %288 = vmatprep.subr.mxu0 0.0
    %289 = vmatpush1.msra.mxu0 %v219
    %290 = vmatprep.subr.mxu0 0.0
    %291 = vmatpush1.msra.mxu0 %v224
    %292 = vmatprep.subr.mxu0 0.0
    %293 = vmatpush1.msra.mxu0 %v229
    %294 = vmatprep.subr.mxu0 0.0
    %295 = vmatpush1.msra.mxu0 %v234
    %296 = vmatprep.subr.mxu0 0.0
    %297 = vmatpush1.msra.mxu0 %v239
    %298 = vmatprep.subr.mxu0 0.0
    %299 = vmatpush1.msra.mxu0 %v244
    %300 = vmatprep.subr.mxu0 0.0
    %301 = vmatpush1.msra.mxu0 %v249
    %302 = vmatprep.subr.mxu0 0.0
    %303 = vmatpush1.msra.mxu0 %v254
    %304 = vmatprep.subr.mxu0 0.0
    %305 = vmatpush1.msra.mxu0 %v259
    %306 = vmatprep.subr.mxu0 0.0
    %307 = vmatpush1.msra.mxu0 %v264
    %308 = vmatprep.subr.mxu0 0.0
    %309 = vmatpush1.msra.mxu0 %v269
    %310 = vmatprep.subr.mxu0 0.0
    %311 = vmatpush1.msra.mxu0 %v274
    %312 = vmatprep.subr.mxu0 0.0
    %313 = vmatpush1.msra.mxu0 %v279
    %314 = vmatprep.subr.mxu0 0.0
    %315 = vmatpush1.msra.mxu0 0.0
    %316 = vmatprep.subr.mxu0 0.0
    %317 = vmatpush1.msra.mxu0 0.0
    %318 = vmatprep.subr.mxu0 0.0
    %319 = vmatpush1.msra.mxu0 0.0
    %320 = vmatprep.subr.mxu0 0.0
    %321 = vmatpush1.msra.mxu0 0.0
    %322 = vmatprep.subr.mxu0 0.0
    %323 = vmatpush1.msra.mxu0 0.0
    %324 = vmatprep.subr.mxu0 0.0
    %325 = vmatpush1.msra.mxu0 0.0
    %326 = vmatprep.subr.mxu0 0.0
    %327 = vmatpush1.msra.mxu0 0.0
    %328 = vmatprep.subr.mxu0 0.0
    %329 = vmatpush1.msra.mxu0 0.0
    %330 = vmatprep.subr.mxu0 0.0
    %331 = vmatpush1.msra.mxu0 0.0
    %332 = vmatprep.subr.mxu0 0.0
    %333 = vmatpush1.msra.mxu0 0.0
    %334 = vmatprep.subr.mxu0 0.0
    %335 = vmatpush1.msra.mxu0 0.0
    %336 = vmatprep.subr.mxu0 0.0
    %337 = vmatpush1.msra.mxu0 0.0
    %338 = vmatprep.subr.mxu0 0.0
    %339 = vmatpush1.msra.mxu0 0.0
    %340 = vmatprep.subr.mxu0 0.0
    %341 = vmatpush1.msra.mxu0 0.0
    %342 = vmatprep.subr.mxu0 0.0
    %343 = vmatpush1.msra.mxu0 0.0
    %344 = vmatprep.subr.mxu0 0.0
    %345 = vmatpush1.msra.mxu0 0.0
    %346 = vmatprep.mubr.f32.mxu0 0.0
    %347 = vmatmul.mubr.f32.gmra.mrb[0].mxu0 %v89
    %v348 = vpop.f32.mrb[0].mxu0
    %v349 = vadd.f32 0.0, %v348
    %v350 = vpop.f32.mrb[0].mxu0
    %351 = vmatprep.mubr.f32.mxu0 0.0
    %352 = vmatmul.mubr.f32.gmra.mrb[0].mxu0 %v90
    %v353 = vpop.f32.mrb[0].mxu0
    %v354 = vadd.f32 0.0, %v353
    %v355 = vpop.f32.mrb[0].mxu0
    %356 = vmatprep.mubr.f32.mxu0 0.0
    %357 = vmatmul.mubr.f32.gmra.mrb[0].mxu0 %v91
    %v358 = vpop.f32.mrb[0].mxu0
    %v359 = vadd.f32 0.0, %v358
    %v360 = vpop.f32.mrb[0].mxu0
    %361 = vmatprep.mubr.f32.mxu0 0.0
    %362 = vmatmul.mubr.f32.gmra.mrb[0].mxu0 %v92
    %v363 = vpop.f32.mrb[0].mxu0
    %v364 = vadd.f32 0.0, %v363
    %v365 = vpop.f32.mrb[0].mxu0
    %366 = vmatprep.mubr.f32.mxu0 0.0
    %367 = vmatmul.mubr.f32.gmra.mrb[0].mxu0 %v93
    %v368 = vpop.f32.mrb[0].mxu0
    %v369 = vadd.f32 0.0, %v368
    %v370 = vpop.f32.mrb[0].mxu0
    %371 = vmatprep.mubr.f32.mxu0 0.0
    %372 = vmatmul.mubr.f32.gmra.mrb[0].mxu0 %v94
    %v373 = vpop.f32.mrb[0].mxu0
    %v374 = vadd.f32 0.0, %v373
    %v375 = vpop.f32.mrb[0].mxu0
    %376 = vmatprep.mubr.f32.mxu0 0.0
    %377 = vmatmul.mubr.f32.gmra.mrb[0].mxu0 %v95
    %v378 = vpop.f32.mrb[0].mxu0
    %v379 = vadd.f32 0.0, %v378
    %v380 = vpop.f32.mrb[0].mxu0
    %381 = vmatprep.mubr.f32.mxu0 0.0
    %382 = vmatmul.mubr.f32.gmra.mrb[0].mxu0 %v96
    %v383 = vpop.f32.mrb[0].mxu0
    %v384 = vadd.f32 0.0, %v383
    %v385 = vpop.f32.mrb[0].mxu0
    %386 = vmatprep.mubr.f32.mxu0 0.0
    %387 = vmatmul.mubr.f32.gmra.mrb[0].mxu0 %v97
    %v388 = vpop.f32.mrb[0].mxu0
    %v389 = vadd.f32 0.0, %v388
    %v390 = vpop.f32.mrb[0].mxu0
    %391 = vmatprep.mubr.f32.mxu0 0.0
    %392 = vmatmul.mubr.f32.gmra.mrb[0].mxu0 %v98
    %v393 = vpop.f32.mrb[0].mxu0
    %v394 = vadd.f32 0.0, %v393
    %v395 = vpop.f32.mrb[0].mxu0
    %396 = vmatprep.mubr.f32.mxu0 0.0
    %397 = vmatmul.mubr.f32.gmra.mrb[0].mxu0 %v99
    %v398 = vpop.f32.mrb[0].mxu0
    %v399 = vadd.f32 0.0, %v398
    %v400 = vpop.f32.mrb[0].mxu0
    %401 = vmatprep.mubr.f32.mxu0 0.0
    %402 = vmatmul.mubr.f32.gmra.mrb[0].mxu0 %v100
    %v403 = vpop.f32.mrb[0].mxu0
    %v404 = vadd.f32 0.0, %v403
    %v405 = vpop.f32.mrb[0].mxu0
    %406 = vmatprep.mubr.f32.mxu0 0.0
    %407 = vmatmul.mubr.f32.gmra.mrb[0].mxu0 %v101
    %v408 = vpop.f32.mrb[0].mxu0
    %v409 = vadd.f32 0.0, %v408
    %v410 = vpop.f32.mrb[0].mxu0
    %411 = vmatprep.mubr.f32.mxu0 0.0
    %412 = vmatmul.mubr.f32.gmra.mrb[0].mxu0 %v102
    %v413 = vpop.f32.mrb[0].mxu0
    %v414 = vadd.f32 0.0, %v413
    %v415 = vpop.f32.mrb[0].mxu0
    %416 = vmatprep.mubr.f32.mxu0 0.0
    %417 = vmatmul.mubr.f32.gmra.mrb[0].mxu0 %v103
    %v418 = vpop.f32.mrb[0].mxu0
    %v419 = vadd.f32 0.0, %v418
    %v420 = vpop.f32.mrb[0].mxu0
    %421 = vmatprep.mubr.f32.mxu0 0.0
    %422 = vmatmul.mubr.f32.gmra.mrb[0].mxu0 %v104
    %v423 = vpop.f32.mrb[0].mxu0
    %v424 = vadd.f32 0.0, %v423
    %v425 = vpop.f32.mrb[0].mxu0
    %426 = vdwg.mxu0
    %v427 = vmax.f32 %v349, 0.0
    %v428 = vmax.f32 %v354, 0.0
    %v429 = vmax.f32 %v359, 0.0
    %v430 = vmax.f32 %v364, 0.0
    %v431 = vmax.f32 %v369, 0.0
    %v432 = vmax.f32 %v374, 0.0
    %v433 = vmax.f32 %v379, 0.0
    %v434 = vmax.f32 %v384, 0.0
    %v435 = vmax.f32 %v389, 0.0
    %v436 = vmax.f32 %v394, 0.0
    %v437 = vmax.f32 %v399, 0.0
    %v438 = vmax.f32 %v404, 0.0
    %v439 = vmax.f32 %v409, 0.0
    %v440 = vmax.f32 %v414, 0.0
    %v441 = vmax.f32 %v419, 0.0
    %v442 = vmax.f32 %v424, 0.0
    %v443 = vld [vmem:[#allocation8] sm:$0xff]
    %v444 = vld [vmem:[#allocation8 + $0x8] sm:$0xff]
    %v445 = vld [vmem:[#allocation8 + $0x10] sm:$0xff]
    %v446 = vld [vmem:[#allocation8 + $0x18] sm:$0xff]
    %v447 = vld [vmem:[#allocation8 + $0x20] sm:$0xff]
    %v448 = vld [vmem:[#allocation8 + $0x28] sm:$0xff]
    %v449 = vld [vmem:[#allocation8 + $0x30] sm:$0xff]
    %v450 = vld [vmem:[#allocation8 + $0x38] sm:$0xff]
    %v451 = vld [vmem:[#allocation8 + $0x40] sm:$0xff]
    %v452 = vld [vmem:[#allocation8 + $0x48] sm:$0xff]
    %v453 = vld [vmem:[#allocation8 + $0x50] sm:$0xff]
    %v454 = vld [vmem:[#allocation8 + $0x58] sm:$0xff]
    %v455 = vld [vmem:[#allocation8 + $0x60] sm:$0xff]
    %v456 = vld [vmem:[#allocation8 + $0x68] sm:$0xff]
    %v457 = vld [vmem:[#allocation8 + $0x70] sm:$0xff]
    %v458 = vld [vmem:[#allocation8 + $0x78] sm:$0xff]
    %459 = vmatprep.subr.mxu0 0.0
    %460 = vmatpush1.msra.mxu0 %v443
    %461 = vmatprep.subr.mxu0 0.0
    %462 = vmatpush1.msra.mxu0 %v444
    %463 = vmatprep.subr.mxu0 0.0
    %464 = vmatpush1.msra.mxu0 %v445
    %465 = vmatprep.subr.mxu0 0.0
    %466 = vmatpush1.msra.mxu0 %v446
    %467 = vmatprep.subr.mxu0 0.0
    %468 = vmatpush1.msra.mxu0 %v447
    %469 = vmatprep.subr.mxu0 0.0
    %470 = vmatpush1.msra.mxu0 %v448
    %471 = vmatprep.subr.mxu0 0.0
    %472 = vmatpush1.msra.mxu0 %v449
    %473 = vmatprep.subr.mxu0 0.0
    %474 = vmatpush1.msra.mxu0 %v450
    %475 = vmatprep.subr.mxu0 0.0
    %476 = vmatpush1.msra.mxu0 %v451
    %477 = vmatprep.subr.mxu0 0.0
    %478 = vmatpush1.msra.mxu0 %v452
    %479 = vmatprep.subr.mxu0 0.0
    %480 = vmatpush1.msra.mxu0 %v453
    %481 = vmatprep.subr.mxu0 0.0
    %482 = vmatpush1.msra.mxu0 %v454
    %483 = vmatprep.subr.mxu0 0.0
    %484 = vmatpush1.msra.mxu0 %v455
    %485 = vmatprep.subr.mxu0 0.0
    %486 = vmatpush1.msra.mxu0 %v456
    %487 = vmatprep.subr.mxu0 0.0
    %488 = vmatpush1.msra.mxu0 %v457
    %489 = vmatprep.subr.mxu0 0.0
    %490 = vmatpush1.msra.mxu0 %v458
    %491 = vmatprep.subr.mxu0 0.0
    %492 = vmatpush1.msra.mxu0 0.0
    %493 = vmatprep.subr.mxu0 0.0
    %494 = vmatpush1.msra.mxu0 0.0
    %495 = vmatprep.subr.mxu0 0.0
    %496 = vmatpush1.msra.mxu0 0.0
    %497 = vmatprep.subr.mxu0 0.0
    %498 = vmatpush1.msra.mxu0 0.0
    %499 = vmatprep.subr.mxu0 0.0
    %500 = vmatpush1.msra.mxu0 0.0
    %501 = vmatprep.subr.mxu0 0.0
    %502 = vmatpush1.msra.mxu0 0.0
    %503 = vmatprep.subr.mxu0 0.0
    %504 = vmatpush1.msra.mxu0 0.0
    %505 = vmatprep.subr.mxu0 0.0
    %506 = vmatpush1.msra.mxu0 0.0
    %507 = vmatprep.subr.mxu0 0.0
    %508 = vmatpush1.msra.mxu0 0.0
    %509 = vmatprep.subr.mxu0 0.0
    %510 = vmatpush1.msra.mxu0 0.0
    %511 = vmatprep.subr.mxu0 0.0
    %512 = vmatpush1.msra.mxu0 0.0
    %513 = vmatprep.subr.mxu0 0.0
    %514 = vmatpush1.msra.mxu0 0.0
    %515 = vmatprep.subr.mxu0 0.0
    %516 = vmatpush1.msra.mxu0 0.0
    %517 = vmatprep.subr.mxu0 0.0
    %518 = vmatpush1.msra.mxu0 0.0
    %519 = vmatprep.subr.mxu0 0.0
    %520 = vmatpush1.msra.mxu0 0.0
    %521 = vmatprep.subr.mxu0 0.0
    %522 = vmatpush1.msra.mxu0 0.0
    %523 = vmatprep.mubr.f32.mxu0 0.0
    %524 = vmatmul.mubr.f32.gmra.mrb[0].mxu0 %v427
    %v525 = vpop.f32.mrb[0].mxu0
    %v526 = vadd.f32 0.0, %v525
    %v527 = vpop.f32.mrb[0].mxu0
    %528 = vmatprep.mubr.f32.mxu0 0.0
    %529 = vmatmul.mubr.f32.gmra.mrb[0].mxu0 %v428
    %v530 = vpop.f32.mrb[0].mxu0
    %v531 = vadd.f32 0.0, %v530
    %v532 = vpop.f32.mrb[0].mxu0
    %533 = vmatprep.mubr.f32.mxu0 0.0
    %534 = vmatmul.mubr.f32.gmra.mrb[0].mxu0 %v429
    %v535 = vpop.f32.mrb[0].mxu0
    %v536 = vadd.f32 0.0, %v535
    %v537 = vpop.f32.mrb[0].mxu0
    %538 = vmatprep.mubr.f32.mxu0 0.0
    %539 = vmatmul.mubr.f32.gmra.mrb[0].mxu0 %v430
    %v540 = vpop.f32.mrb[0].mxu0
    %v541 = vadd.f32 0.0, %v540
    %v542 = vpop.f32.mrb[0].mxu0
    %543 = vmatprep.mubr.f32.mxu0 0.0
    %544 = vmatmul.mubr.f32.gmra.mrb[0].mxu0 %v431
    %v545 = vpop.f32.mrb[0].mxu0
    %v546 = vadd.f32 0.0, %v545
    %v547 = vpop.f32.mrb[0].mxu0
    %548 = vmatprep.mubr.f32.mxu0 0.0
    %549 = vmatmul.mubr.f32.gmra.mrb[0].mxu0 %v432
    %v550 = vpop.f32.mrb[0].mxu0
    %v551 = vadd.f32 0.0, %v550
    %v552 = vpop.f32.mrb[0].mxu0
    %553 = vmatprep.mubr.f32.mxu0 0.0
    %554 = vmatmul.mubr.f32.gmra.mrb[0].mxu0 %v433
    %v555 = vpop.f32.mrb[0].mxu0
    %v556 = vadd.f32 0.0, %v555
    %v557 = vpop.f32.mrb[0].mxu0
    %558 = vmatprep.mubr.f32.mxu0 0.0
    %559 = vmatmul.mubr.f32.gmra.mrb[0].mxu0 %v434
    %v560 = vpop.f32.mrb[0].mxu0
    %v561 = vadd.f32 0.0, %v560
    %v562 = vpop.f32.mrb[0].mxu0
    %563 = vmatprep.mubr.f32.mxu0 0.0
    %564 = vmatmul.mubr.f32.gmra.mrb[0].mxu0 %v435
    %v565 = vpop.f32.mrb[0].mxu0
    %v566 = vadd.f32 0.0, %v565
    %v567 = vpop.f32.mrb[0].mxu0
    %568 = vmatprep.mubr.f32.mxu0 0.0
    %569 = vmatmul.mubr.f32.gmra.mrb[0].mxu0 %v436
    %v570 = vpop.f32.mrb[0].mxu0
    %v571 = vadd.f32 0.0, %v570
    %v572 = vpop.f32.mrb[0].mxu0
    %573 = vmatprep.mubr.f32.mxu0 0.0
    %574 = vmatmul.mubr.f32.gmra.mrb[0].mxu0 %v437
    %v575 = vpop.f32.mrb[0].mxu0
    %v576 = vadd.f32 0.0, %v575
    %v577 = vpop.f32.mrb[0].mxu0
    %578 = vmatprep.mubr.f32.mxu0 0.0
    %579 = vmatmul.mubr.f32.gmra.mrb[0].mxu0 %v438
    %v580 = vpop.f32.mrb[0].mxu0
    %v581 = vadd.f32 0.0, %v580
    %v582 = vpop.f32.mrb[0].mxu0
    %583 = vmatprep.mubr.f32.mxu0 0.0
    %584 = vmatmul.mubr.f32.gmra.mrb[0].mxu0 %v439
    %v585 = vpop.f32.mrb[0].mxu0
    %v586 = vadd.f32 0.0, %v585
    %v587 = vpop.f32.mrb[0].mxu0
    %588 = vmatprep.mubr.f32.mxu0 0.0
    %589 = vmatmul.mubr.f32.gmra.mrb[0].mxu0 %v440
    %v590 = vpop.f32.mrb[0].mxu0
    %v591 = vadd.f32 0.0, %v590
    %v592 = vpop.f32.mrb[0].mxu0
    %593 = vmatprep.mubr.f32.mxu0 0.0
    %594 = vmatmul.mubr.f32.gmra.mrb[0].mxu0 %v441
    %v595 = vpop.f32.mrb[0].mxu0
    %v596 = vadd.f32 0.0, %v595
    %v597 = vpop.f32.mrb[0].mxu0
    %598 = vmatprep.mubr.f32.mxu0 0.0
    %599 = vmatmul.mubr.f32.gmra.mrb[0].mxu0 %v442
    %v600 = vpop.f32.mrb[0].mxu0
    %v601 = vadd.f32 0.0, %v600
    %v602 = vpop.f32.mrb[0].mxu0
    %603 = vdwg.mxu0
    %604 = vmatprep.subr.mxu0 0.0
    %605 = vmatpush1.msra.mxu0 %v526
    %606 = vmatprep.subr.mxu0 0.0
    %607 = vmatpush1.msra.mxu0 %v531
    %608 = vmatprep.subr.mxu0 0.0
    %609 = vmatpush1.msra.mxu0 %v536
    %610 = vmatprep.subr.mxu0 0.0
    %611 = vmatpush1.msra.mxu0 %v541
    %612 = vmatprep.subr.mxu0 0.0
    %613 = vmatpush1.msra.mxu0 %v546
    %614 = vmatprep.subr.mxu0 0.0
    %615 = vmatpush1.msra.mxu0 %v551
    %616 = vmatprep.subr.mxu0 0.0
    %617 = vmatpush1.msra.mxu0 %v556
    %618 = vmatprep.subr.mxu0 0.0
    %619 = vmatpush1.msra.mxu0 %v561
    %620 = vmatprep.subr.mxu0 0.0
    %621 = vmatpush1.msra.mxu0 %v566
    %622 = vmatprep.subr.mxu0 0.0
    %623 = vmatpush1.msra.mxu0 %v571
    %624 = vmatprep.subr.mxu0 0.0
    %625 = vmatpush1.msra.mxu0 %v576
    %626 = vmatprep.subr.mxu0 0.0
    %627 = vmatpush1.msra.mxu0 %v581
    %628 = vmatprep.subr.mxu0 0.0
    %629 = vmatpush1.msra.mxu0 %v586
    %630 = vmatprep.subr.mxu0 0.0
    %631 = vmatpush1.msra.mxu0 %v591
    %632 = vmatprep.subr.mxu0 0.0
    %633 = vmatpush1.msra.mxu0 %v596
    %634 = vmatprep.subr.mxu0 0.0
    %635 = vmatpush1.msra.mxu0 %v601
    %636 = vmatprep.subr.mxu0 0.0
    %637 = vmatpush1.msra.mxu0 0.0
    %638 = vmatprep.subr.mxu0 0.0
    %639 = vmatpush1.msra.mxu0 0.0
    %640 = vmatprep.subr.mxu0 0.0
    %641 = vmatpush1.msra.mxu0 0.0
    %642 = vmatprep.subr.mxu0 0.0
    %643 = vmatpush1.msra.mxu0 0.0
    %644 = vmatprep.subr.mxu0 0.0
    %645 = vmatpush1.msra.mxu0 0.0
    %646 = vmatprep.subr.mxu0 0.0
    %647 = vmatpush1.msra.mxu0 0.0
    %648 = vmatprep.subr.mxu0 0.0
    %649 = vmatpush1.msra.mxu0 0.0
    %650 = vmatprep.subr.mxu0 0.0
    %651 = vmatpush1.msra.mxu0 0.0
    %652 = vmatprep.subr.mxu0 0.0
    %653 = vmatpush1.msra.mxu0 0.0
    %654 = vmatprep.subr.mxu0 0.0
    %655 = vmatpush1.msra.mxu0 0.0
    %656 = vmatprep.subr.mxu0 0.0
    %657 = vmatpush1.msra.mxu0 0.0
    %658 = vmatprep.subr.mxu0 0.0
    %659 = vmatpush1.msra.mxu0 0.0
    %660 = vmatprep.subr.mxu0 0.0
    %661 = vmatpush1.msra.mxu0 0.0
    %662 = vmatprep.subr.mxu0 0.0
    %663 = vmatpush1.msra.mxu0 0.0
    %664 = vmatprep.subr.mxu0 0.0
    %665 = vmatpush1.msra.mxu0 0.0
    %666 = vmatprep.subr.mxu0 0.0
    %667 = vmatpush1.msra.mxu0 0.0
    %668 = vmatprep.mubr.f32.mxu0 0.0
    %669 = vmatmul.mubr.f32.gmra.mrb[0].mxu0 %v89
    %v670 = vpop.f32.mrb[0].mxu0
    %v671 = vadd.f32 0.0, %v670
    %v672 = vpop.f32.mrb[0].mxu0
    %673 = vmatprep.mubr.f32.mxu0 0.0
    %674 = vmatmul.mubr.f32.gmra.mrb[0].mxu0 %v90
    %v675 = vpop.f32.mrb[0].mxu0
    %v676 = vadd.f32 0.0, %v675
    %v677 = vpop.f32.mrb[0].mxu0
    %678 = vmatprep.mubr.f32.mxu0 0.0
    %679 = vmatmul.mubr.f32.gmra.mrb[0].mxu0 %v91
    %v680 = vpop.f32.mrb[0].mxu0
    %v681 = vadd.f32 0.0, %v680
    %v682 = vpop.f32.mrb[0].mxu0
    %683 = vmatprep.mubr.f32.mxu0 0.0
    %684 = vmatmul.mubr.f32.gmra.mrb[0].mxu0 %v92
    %v685 = vpop.f32.mrb[0].mxu0
    %v686 = vadd.f32 0.0, %v685
    %v687 = vpop.f32.mrb[0].mxu0
    %688 = vmatprep.mubr.f32.mxu0 0.0
    %689 = vmatmul.mubr.f32.gmra.mrb[0].mxu0 %v93
    %v690 = vpop.f32.mrb[0].mxu0
    %v691 = vadd.f32 0.0, %v690
    %v692 = vpop.f32.mrb[0].mxu0
    %693 = vmatprep.mubr.f32.mxu0 0.0
    %694 = vmatmul.mubr.f32.gmra.mrb[0].mxu0 %v94
    %v695 = vpop.f32.mrb[0].mxu0
    %v696 = vadd.f32 0.0, %v695
    %v697 = vpop.f32.mrb[0].mxu0
    %698 = vmatprep.mubr.f32.mxu0 0.0
    %699 = vmatmul.mubr.f32.gmra.mrb[0].mxu0 %v95
    %v700 = vpop.f32.mrb[0].mxu0
    %v701 = vadd.f32 0.0, %v700
    %v702 = vpop.f32.mrb[0].mxu0
    %703 = vmatprep.mubr.f32.mxu0 0.0
    %704 = vmatmul.mubr.f32.gmra.mrb[0].mxu0 %v96
    %v705 = vpop.f32.mrb[0].mxu0
    %v706 = vadd.f32 0.0, %v705
    %v707 = vpop.f32.mrb[0].mxu0
    %708 = vmatprep.mubr.f32.mxu0 0.0
    %709 = vmatmul.mubr.f32.gmra.mrb[0].mxu0 %v97
    %v710 = vpop.f32.mrb[0].mxu0
    %v711 = vadd.f32 0.0, %v710
    %v712 = vpop.f32.mrb[0].mxu0
    %713 = vmatprep.mubr.f32.mxu0 0.0
    %714 = vmatmul.mubr.f32.gmra.mrb[0].mxu0 %v98
    %v715 = vpop.f32.mrb[0].mxu0
    %v716 = vadd.f32 0.0, %v715
    %v717 = vpop.f32.mrb[0].mxu0
    %718 = vmatprep.mubr.f32.mxu0 0.0
    %719 = vmatmul.mubr.f32.gmra.mrb[0].mxu0 %v99
    %v720 = vpop.f32.mrb[0].mxu0
    %v721 = vadd.f32 0.0, %v720
    %v722 = vpop.f32.mrb[0].mxu0
    %723 = vmatprep.mubr.f32.mxu0 0.0
    %724 = vmatmul.mubr.f32.gmra.mrb[0].mxu0 %v100
    %v725 = vpop.f32.mrb[0].mxu0
    %v726 = vadd.f32 0.0, %v725
    %v727 = vpop.f32.mrb[0].mxu0
    %728 = vmatprep.mubr.f32.mxu0 0.0
    %729 = vmatmul.mubr.f32.gmra.mrb[0].mxu0 %v101
    %v730 = vpop.f32.mrb[0].mxu0
    %v731 = vadd.f32 0.0, %v730
    %v732 = vpop.f32.mrb[0].mxu0
    %733 = vmatprep.mubr.f32.mxu0 0.0
    %734 = vmatmul.mubr.f32.gmra.mrb[0].mxu0 %v102
    %v735 = vpop.f32.mrb[0].mxu0
    %v736 = vadd.f32 0.0, %v735
    %v737 = vpop.f32.mrb[0].mxu0
    %738 = vmatprep.mubr.f32.mxu0 0.0
    %739 = vmatmul.mubr.f32.gmra.mrb[0].mxu0 %v103
    %v740 = vpop.f32.mrb[0].mxu0
    %v741 = vadd.f32 0.0, %v740
    %v742 = vpop.f32.mrb[0].mxu0
    %743 = vmatprep.mubr.f32.mxu0 0.0
    %744 = vmatmul.mubr.f32.gmra.mrb[0].mxu0 %v104
    %v745 = vpop.f32.mrb[0].mxu0
    %v746 = vadd.f32 0.0, %v745
    %v747 = vpop.f32.mrb[0].mxu0
    %748 = vdwg.mxu0
    %v749 = vmax.f32 %v671, 0.0
    %v750 = vmax.f32 %v676, 0.0
    %v751 = vmax.f32 %v681, 0.0
    %v752 = vmax.f32 %v686, 0.0
    %v753 = vmax.f32 %v691, 0.0
    %v754 = vmax.f32 %v696, 0.0
    %v755 = vmax.f32 %v701, 0.0
    %v756 = vmax.f32 %v706, 0.0
    %v757 = vmax.f32 %v711, 0.0
    %v758 = vmax.f32 %v716, 0.0
    %v759 = vmax.f32 %v721, 0.0
    %v760 = vmax.f32 %v726, 0.0
    %v761 = vmax.f32 %v731, 0.0
    %v762 = vmax.f32 %v736, 0.0
    %v763 = vmax.f32 %v741, 0.0
    %v764 = vmax.f32 %v746, 0.0
    %v765 = vld [vmem:[#allocation10] sm:$0xff]
    %v766 = vld [vmem:[#allocation10 + $0x8] sm:$0xff]
    %v767 = vld [vmem:[#allocation10 + $0x10] sm:$0xff]
    %v768 = vld [vmem:[#allocation10 + $0x18] sm:$0xff]
    %v769 = vld [vmem:[#allocation10 + $0x20] sm:$0xff]
    %v770 = vld [vmem:[#allocation10 + $0x28] sm:$0xff]
    %v771 = vld [vmem:[#allocation10 + $0x30] sm:$0xff]
    %v772 = vld [vmem:[#allocation10 + $0x38] sm:$0xff]
    %v773 = vld [vmem:[#allocation10 + $0x40] sm:$0xff]
    %v774 = vld [vmem:[#allocation10 + $0x48] sm:$0xff]
    %v775 = vld [vmem:[#allocation10 + $0x50] sm:$0xff]
    %v776 = vld [vmem:[#allocation10 + $0x58] sm:$0xff]
    %v777 = vld [vmem:[#allocation10 + $0x60] sm:$0xff]
    %v778 = vld [vmem:[#allocation10 + $0x68] sm:$0xff]
    %v779 = vld [vmem:[#allocation10 + $0x70] sm:$0xff]
    %v780 = vld [vmem:[#allocation10 + $0x78] sm:$0xff]
    %781 = vmatprep.subr.mxu0 0.0
    %782 = vmatpush1.msra.mxu0 %v765
    %783 = vmatprep.subr.mxu0 0.0
    %784 = vmatpush1.msra.mxu0 %v766
    %785 = vmatprep.subr.mxu0 0.0
    %786 = vmatpush1.msra.mxu0 %v767
    %787 = vmatprep.subr.mxu0 0.0
    %788 = vmatpush1.msra.mxu0 %v768
    %789 = vmatprep.subr.mxu0 0.0
    %790 = vmatpush1.msra.mxu0 %v769
    %791 = vmatprep.subr.mxu0 0.0
    %792 = vmatpush1.msra.mxu0 %v770
    %793 = vmatprep.subr.mxu0 0.0
    %794 = vmatpush1.msra.mxu0 %v771
    %795 = vmatprep.subr.mxu0 0.0
    %796 = vmatpush1.msra.mxu0 %v772
    %797 = vmatprep.subr.mxu0 0.0
    %798 = vmatpush1.msra.mxu0 %v773
    %799 = vmatprep.subr.mxu0 0.0
    %800 = vmatpush1.msra.mxu0 %v774
    %801 = vmatprep.subr.mxu0 0.0
    %802 = vmatpush1.msra.mxu0 %v775
    %803 = vmatprep.subr.mxu0 0.0
    %804 = vmatpush1.msra.mxu0 %v776
    %805 = vmatprep.subr.mxu0 0.0
    %806 = vmatpush1.msra.mxu0 %v777
    %807 = vmatprep.subr.mxu0 0.0
    %808 = vmatpush1.msra.mxu0 %v778
    %809 = vmatprep.subr.mxu0 0.0
    %810 = vmatpush1.msra.mxu0 %v779
    %811 = vmatprep.subr.mxu0 0.0
    %812 = vmatpush1.msra.mxu0 %v780
    %813 = vmatprep.subr.mxu0 0.0
    %814 = vmatpush1.msra.mxu0 0.0
    %815 = vmatprep.subr.mxu0 0.0
    %816 = vmatpush1.msra.mxu0 0.0
    %817 = vmatprep.subr.mxu0 0.0
    %818 = vmatpush1.msra.mxu0 0.0
    %819 = vmatprep.subr.mxu0 0.0
    %820 = vmatpush1.msra.mxu0 0.0
    %821 = vmatprep.subr.mxu0 0.0
    %822 = vmatpush1.msra.mxu0 0.0
    %823 = vmatprep.subr.mxu0 0.0
    %824 = vmatpush1.msra.mxu0 0.0
    %825 = vmatprep.subr.mxu0 0.0
    %826 = vmatpush1.msra.mxu0 0.0
    %827 = vmatprep.subr.mxu0 0.0
    %828 = vmatpush1.msra.mxu0 0.0
    %829 = vmatprep.subr.mxu0 0.0
    %830 = vmatpush1.msra.mxu0 0.0
    %831 = vmatprep.subr.mxu0 0.0
    %832 = vmatpush1.msra.mxu0 0.0
    %833 = vmatprep.subr.mxu0 0.0
    %834 = vmatpush1.msra.mxu0 0.0
    %835 = vmatprep.subr.mxu0 0.0
    %836 = vmatpush1.msra.mxu0 0.0
    %837 = vmatprep.subr.mxu0 0.0
    %838 = vmatpush1.msra.mxu0 0.0
    %839 = vmatprep.subr.mxu0 0.0
    %840 = vmatpush1.msra.mxu0 0.0
    %841 = vmatprep.subr.mxu0 0.0
    %842 = vmatpush1.msra.mxu0 0.0
    %843 = vmatprep.subr.mxu0 0.0
    %844 = vmatpush1.msra.mxu0 0.0
    %845 = vmatprep.mubr.f32.mxu0 0.0
    %846 = vmatmul.mubr.f32.gmra.mrb[0].mxu0 %v749
    %v847 = vpop.f32.mrb[0].mxu0
    %v848 = vadd.f32 0.0, %v847
    %v849 = vpop.f32.mrb[0].mxu0
    %850 = vmatprep.mubr.f32.mxu0 0.0
    %851 = vmatmul.mubr.f32.gmra.mrb[0].mxu0 %v750
    %v852 = vpop.f32.mrb[0].mxu0
    %v853 = vadd.f32 0.0, %v852
    %v854 = vpop.f32.mrb[0].mxu0
    %855 = vmatprep.mubr.f32.mxu0 0.0
    %856 = vmatmul.mubr.f32.gmra.mrb[0].mxu0 %v751
    %v857 = vpop.f32.mrb[0].mxu0
    %v858 = vadd.f32 0.0, %v857
    %v859 = vpop.f32.mrb[0].mxu0
    %860 = vmatprep.mubr.f32.mxu0 0.0
    %861 = vmatmul.mubr.f32.gmra.mrb[0].mxu0 %v752
    %v862 = vpop.f32.mrb[0].mxu0
    %v863 = vadd.f32 0.0, %v862
    %v864 = vpop.f32.mrb[0].mxu0
    %865 = vmatprep.mubr.f32.mxu0 0.0
    %866 = vmatmul.mubr.f32.gmra.mrb[0].mxu0 %v753
    %v867 = vpop.f32.mrb[0].mxu0
    %v868 = vadd.f32 0.0, %v867
    %v869 = vpop.f32.mrb[0].mxu0
    %870 = vmatprep.mubr.f32.mxu0 0.0
    %871 = vmatmul.mubr.f32.gmra.mrb[0].mxu0 %v754
    %v872 = vpop.f32.mrb[0].mxu0
    %v873 = vadd.f32 0.0, %v872
    %v874 = vpop.f32.mrb[0].mxu0
    %875 = vmatprep.mubr.f32.mxu0 0.0
    %876 = vmatmul.mubr.f32.gmra.mrb[0].mxu0 %v755
    %v877 = vpop.f32.mrb[0].mxu0
    %v878 = vadd.f32 0.0, %v877
    %v879 = vpop.f32.mrb[0].mxu0
    %880 = vmatprep.mubr.f32.mxu0 0.0
    %881 = vmatmul.mubr.f32.gmra.mrb[0].mxu0 %v756
    %v882 = vpop.f32.mrb[0].mxu0
    %v883 = vadd.f32 0.0, %v882
    %v884 = vpop.f32.mrb[0].mxu0
    %885 = vmatprep.mubr.f32.mxu0 0.0
    %886 = vmatmul.mubr.f32.gmra.mrb[0].mxu0 %v757
    %v887 = vpop.f32.mrb[0].mxu0
    %v888 = vadd.f32 0.0, %v887
    %v889 = vpop.f32.mrb[0].mxu0
    %890 = vmatprep.mubr.f32.mxu0 0.0
    %891 = vmatmul.mubr.f32.gmra.mrb[0].mxu0 %v758
    %v892 = vpop.f32.mrb[0].mxu0
    %v893 = vadd.f32 0.0, %v892
    %v894 = vpop.f32.mrb[0].mxu0
    %895 = vmatprep.mubr.f32.mxu0 0.0
    %896 = vmatmul.mubr.f32.gmra.mrb[0].mxu0 %v759
    %v897 = vpop.f32.mrb[0].mxu0
    %v898 = vadd.f32 0.0, %v897
    %v899 = vpop.f32.mrb[0].mxu0
    %900 = vmatprep.mubr.f32.mxu0 0.0
    %901 = vmatmul.mubr.f32.gmra.mrb[0].mxu0 %v760
    %v902 = vpop.f32.mrb[0].mxu0
    %v903 = vadd.f32 0.0, %v902
    %v904 = vpop.f32.mrb[0].mxu0
    %905 = vmatprep.mubr.f32.mxu0 0.0
    %906 = vmatmul.mubr.f32.gmra.mrb[0].mxu0 %v761
    %v907 = vpop.f32.mrb[0].mxu0
    %v908 = vadd.f32 0.0, %v907
    %v909 = vpop.f32.mrb[0].mxu0
    %910 = vmatprep.mubr.f32.mxu0 0.0
    %911 = vmatmul.mubr.f32.gmra.mrb[0].mxu0 %v762
    %v912 = vpop.f32.mrb[0].mxu0
    %v913 = vadd.f32 0.0, %v912
    %v914 = vpop.f32.mrb[0].mxu0
    %915 = vmatprep.mubr.f32.mxu0 0.0
    %916 = vmatmul.mubr.f32.gmra.mrb[0].mxu0 %v763
    %v917 = vpop.f32.mrb[0].mxu0
    %v918 = vadd.f32 0.0, %v917
    %v919 = vpop.f32.mrb[0].mxu0
    %920 = vmatprep.mubr.f32.mxu0 0.0
    %921 = vmatmul.mubr.f32.gmra.mrb[0].mxu0 %v764
    %v922 = vpop.f32.mrb[0].mxu0
    %v923 = vadd.f32 0.0, %v922
    %v924 = vpop.f32.mrb[0].mxu0
    %925 = vdwg.mxu0
    %926 = vmatprep.subr.mxu0 0.0
    %927 = vmatpush1.msra.mxu0 %v848
    %928 = vmatprep.subr.mxu0 0.0
    %929 = vmatpush1.msra.mxu0 %v853
    %930 = vmatprep.subr.mxu0 0.0
    %931 = vmatpush1.msra.mxu0 %v858
    %932 = vmatprep.subr.mxu0 0.0
    %933 = vmatpush1.msra.mxu0 %v863
    %934 = vmatprep.subr.mxu0 0.0
    %935 = vmatpush1.msra.mxu0 %v868
    %936 = vmatprep.subr.mxu0 0.0
    %937 = vmatpush1.msra.mxu0 %v873
    %938 = vmatprep.subr.mxu0 0.0
    %939 = vmatpush1.msra.mxu0 %v878
    %940 = vmatprep.subr.mxu0 0.0
    %941 = vmatpush1.msra.mxu0 %v883
    %942 = vmatprep.subr.mxu0 0.0
    %943 = vmatpush1.msra.mxu0 %v888
    %944 = vmatprep.subr.mxu0 0.0
    %945 = vmatpush1.msra.mxu0 %v893
    %946 = vmatprep.subr.mxu0 0.0
    %947 = vmatpush1.msra.mxu0 %v898
    %948 = vmatprep.subr.mxu0 0.0
    %949 = vmatpush1.msra.mxu0 %v903
    %950 = vmatprep.subr.mxu0 0.0
    %951 = vmatpush1.msra.mxu0 %v908
    %952 = vmatprep.subr.mxu0 0.0
    %953 = vmatpush1.msra.mxu0 %v913
    %954 = vmatprep.subr.mxu0 0.0
    %955 = vmatpush1.msra.mxu0 %v918
    %956 = vmatprep.subr.mxu0 0.0
    %957 = vmatpush1.msra.mxu0 %v923
    %958 = vmatprep.subr.mxu0 0.0
    %959 = vmatpush1.msra.mxu0 0.0
    %960 = vmatprep.subr.mxu0 0.0
    %961 = vmatpush1.msra.mxu0 0.0
    %962 = vmatprep.subr.mxu0 0.0
    %963 = vmatpush1.msra.mxu0 0.0
    %964 = vmatprep.subr.mxu0 0.0
    %965 = vmatpush1.msra.mxu0 0.0
    %966 = vmatprep.subr.mxu0 0.0
    %967 = vmatpush1.msra.mxu0 0.0
    %968 = vmatprep.subr.mxu0 0.0
    %969 = vmatpush1.msra.mxu0 0.0
    %970 = vmatprep.subr.mxu0 0.0
    %971 = vmatpush1.msra.mxu0 0.0
    %972 = vmatprep.subr.mxu0 0.0
    %973 = vmatpush1.msra.mxu0 0.0
    %974 = vmatprep.subr.mxu0 0.0
    %975 = vmatpush1.msra.mxu0 0.0
    %976 = vmatprep.subr.mxu0 0.0
    %977 = vmatpush1.msra.mxu0 0.0
    %978 = vmatprep.subr.mxu0 0.0
    %979 = vmatpush1.msra.mxu0 0.0
    %980 = vmatprep.subr.mxu0 0.0
    %981 = vmatpush1.msra.mxu0 0.0
    %982 = vmatprep.subr.mxu0 0.0
    %983 = vmatpush1.msra.mxu0 0.0
    %984 = vmatprep.subr.mxu0 0.0
    %985 = vmatpush1.msra.mxu0 0.0
    %986 = vmatprep.subr.mxu0 0.0
    %987 = vmatpush1.msra.mxu0 0.0
    %988 = vmatprep.subr.mxu0 0.0
    %989 = vmatpush1.msra.mxu0 0.0
    %990 = vmatprep.mubr.f32.mxu0 0.0
    %991 = vmatmul.mubr.f32.gmra.mrb[0].mxu0 %v89
    %v992 = vpop.f32.mrb[0].mxu0
    %v993 = vadd.f32 0.0, %v992
    %v994 = vpop.f32.mrb[0].mxu0
    %995 = vmatprep.mubr.f32.mxu0 0.0
    %996 = vmatmul.mubr.f32.gmra.mrb[0].mxu0 %v90
    %v997 = vpop.f32.mrb[0].mxu0
    %v998 = vadd.f32 0.0, %v997
    %v999 = vpop.f32.mrb[0].mxu0
    %1000 = vmatprep.mubr.f32.mxu0 0.0
    %1001 = vmatmul.mubr.f32.gmra.mrb[0].mxu0 %v91
    %v1002 = vpop.f32.mrb[0].mxu0
    %v1003 = vadd.f32 0.0, %v1002
    %v1004 = vpop.f32.mrb[0].mxu0
    %1005 = vmatprep.mubr.f32.mxu0 0.0
    %1006 = vmatmul.mubr.f32.gmra.mrb[0].mxu0 %v92
    %v1007 = vpop.f32.mrb[0].mxu0
    %v1008 = vadd.f32 0.0, %v1007
    %v1009 = vpop.f32.mrb[0].mxu0
    %1010 = vmatprep.mubr.f32.mxu0 0.0
    %1011 = vmatmul.mubr.f32.gmra.mrb[0].mxu0 %v93
    %v1012 = vpop.f32.mrb[0].mxu0
    %v1013 = vadd.f32 0.0, %v1012
    %v1014 = vpop.f32.mrb[0].mxu0
    %1015 = vmatprep.mubr.f32.mxu0 0.0
    %1016 = vmatmul.mubr.f32.gmra.mrb[0].mxu0 %v94
    %v1017 = vpop.f32.mrb[0].mxu0
    %v1018 = vadd.f32 0.0, %v1017
    %v1019 = vpop.f32.mrb[0].mxu0
    %1020 = vmatprep.mubr.f32.mxu0 0.0
    %1021 = vmatmul.mubr.f32.gmra.mrb[0].mxu0 %v95
    %v1022 = vpop.f32.mrb[0].mxu0
    %v1023 = vadd.f32 0.0, %v1022
    %v1024 = vpop.f32.mrb[0].mxu0
    %1025 = vmatprep.mubr.f32.mxu0 0.0
    %1026 = vmatmul.mubr.f32.gmra.mrb[0].mxu0 %v96
    %v1027 = vpop.f32.mrb[0].mxu0
    %v1028 = vadd.f32 0.0, %v1027
    %v1029 = vpop.f32.mrb[0].mxu0
    %1030 = vmatprep.mubr.f32.mxu0 0.0
    %1031 = vmatmul.mubr.f32.gmra.mrb[0].mxu0 %v97
    %v1032 = vpop.f32.mrb[0].mxu0
    %v1033 = vadd.f32 0.0, %v1032
    %v1034 = vpop.f32.mrb[0].mxu0
    %1035 = vmatprep.mubr.f32.mxu0 0.0
    %1036 = vmatmul.mubr.f32.gmra.mrb[0].mxu0 %v98
    %v1037 = vpop.f32.mrb[0].mxu0
    %v1038 = vadd.f32 0.0, %v1037
    %v1039 = vpop.f32.mrb[0].mxu0
    %1040 = vmatprep.mubr.f32.mxu0 0.0
    %1041 = vmatmul.mubr.f32.gmra.mrb[0].mxu0 %v99
    %v1042 = vpop.f32.mrb[0].mxu0
    %v1043 = vadd.f32 0.0, %v1042
    %v1044 = vpop.f32.mrb[0].mxu0
    %1045 = vmatprep.mubr.f32.mxu0 0.0
    %1046 = vmatmul.mubr.f32.gmra.mrb[0].mxu0 %v100
    %v1047 = vpop.f32.mrb[0].mxu0
    %v1048 = vadd.f32 0.0, %v1047
    %v1049 = vpop.f32.mrb[0].mxu0
    %1050 = vmatprep.mubr.f32.mxu0 0.0
    %1051 = vmatmul.mubr.f32.gmra.mrb[0].mxu0 %v101
    %v1052 = vpop.f32.mrb[0].mxu0
    %v1053 = vadd.f32 0.0, %v1052
    %v1054 = vpop.f32.mrb[0].mxu0
    %1055 = vmatprep.mubr.f32.mxu0 0.0
    %1056 = vmatmul.mubr.f32.gmra.mrb[0].mxu0 %v102
    %v1057 = vpop.f32.mrb[0].mxu0
    %v1058 = vadd.f32 0.0, %v1057
    %v1059 = vpop.f32.mrb[0].mxu0
    %1060 = vmatprep.mubr.f32.mxu0 0.0
    %1061 = vmatmul.mubr.f32.gmra.mrb[0].mxu0 %v103
    %v1062 = vpop.f32.mrb[0].mxu0
    %v1063 = vadd.f32 0.0, %v1062
    %v1064 = vpop.f32.mrb[0].mxu0
    %1065 = vmatprep.mubr.f32.mxu0 0.0
    %1066 = vmatmul.mubr.f32.gmra.mrb[0].mxu0 %v104
    %v1067 = vpop.f32.mrb[0].mxu0
    %v1068 = vadd.f32 0.0, %v1067
    %v1069 = vpop.f32.mrb[0].mxu0
    %1070 = vdwg.mxu0
    %1071 = vst [vmem:[#allocation11] sm:$0xff] %v993
    %1072 = vst [vmem:[#allocation11 + $0x8] sm:$0xff] %v998
    %1073 = vst [vmem:[#allocation11 + $0x10] sm:$0xff] %v1003
    %1074 = vst [vmem:[#allocation11 + $0x18] sm:$0xff] %v1008
    %1075 = vst [vmem:[#allocation11 + $0x20] sm:$0xff] %v1013
    %1076 = vst [vmem:[#allocation11 + $0x28] sm:$0xff] %v1018
    %1077 = vst [vmem:[#allocation11 + $0x30] sm:$0xff] %v1023
    %1078 = vst [vmem:[#allocation11 + $0x38] sm:$0xff] %v1028
    %1079 = vst [vmem:[#allocation11 + $0x40] sm:$0xff] %v1033
    %1080 = vst [vmem:[#allocation11 + $0x48] sm:$0xff] %v1038
    %1081 = vst [vmem:[#allocation11 + $0x50] sm:$0xff] %v1043
    %1082 = vst [vmem:[#allocation11 + $0x58] sm:$0xff] %v1048
    %1083 = vst [vmem:[#allocation11 + $0x60] sm:$0xff] %v1053
    %1084 = vst [vmem:[#allocation11 + $0x68] sm:$0xff] %v1058
    %1085 = vst [vmem:[#allocation11 + $0x70] sm:$0xff] %v1063
    %1086 = vst [vmem:[#allocation11 + $0x78] sm:$0xff] %v1068
    // Predicated region
    $region42: #{tpu_custom_call.1} parent=1 // pred_check
      _
    $region43: #{tpu_custom_call.1} parent=1 // pred_check_branch
      %1088 = sbr.rel (0) target = $region45
    $region44: #{tpu_custom_call.1} parent=1 // pred_region
      %s1090 = ssub.s32 2048, 2048
      %1091 = vsyncadd [#allocation4], %s1090
      %s1092 = sshll.u32 [#allocation11], 4
      %s1093 = int_to_ptr.vmem [resolvable:$true] %s1092
      %1098 = dma.vmem_to_hbm [thread:$0]  %s1093, 2048, %s5, [#allocation4], 128, 128, 8
    $region45: #{tpu_custom_call.1} parent=1 // pred_fallthru
      _
    // Predicated region
    $region46: #{tpu_custom_call.1} parent=1 // pred_check
      _
    $region47: #{tpu_custom_call.1} parent=1 // pred_check_branch
      %1100 = sbr.rel (0) target = $region49
    $region48: #{tpu_custom_call.1} parent=1 // pred_region
      %1101 = dma.done [#allocation4], 2048
    $region49: #{tpu_custom_call.1} parent=1 // pred_fallthru
      _
    %1102 = vsyncpa [#allocation3], 1
    %1103 = vsyncpa [#allocation6], 1
    %1104 = vsyncpa [#allocation9], 1
    %1105 = vsyncpa [#allocation4], 1

</llo_original>
